<compile_context>
chip_gen: v6e
topology: v6e:2x2x1
jax: 0.10.0
libtpu: 0.0.40
codegen_flags: <defaults>
</compile_context>

<pallas_src>
import functools

import jax
import jax.numpy as jnp
from jax.experimental import pallas as pl
from jax.experimental.pallas import tpu as pltpu

LANES = 128
WIDE_LANES = 1024               # 8 * 128: longer unmasked vld/vst runs when size allows
RAGGED_BLOCK_ELEMS = 64 * 1024  # 256 KiB f32 per block on the (uncommon) ragged path


def _round_up(n, m):
    return ((n + m - 1) // m) * m


def _round_down(n, m):
    return (n // m) * m


def _row_alignment(*dtypes):
    # Sublane tile grows as the dtype narrows: f32 -> 8, bf16 -> 16, i8 -> 32.
    align = 8
    for dt in dtypes:
        itemsize = jnp.dtype(dt).itemsize
        align = max(align, 8 * max(1, 4 // itemsize))
    return align


@functools.lru_cache(maxsize=None)
def _block_rows_budget():
    """Per-grid-step block budget, in units of (rows, 128) f32 rows."""
    try:
        kind = jax.devices()[0].device_kind.lower()
    except Exception:
        return 4096
    if ("v6" in kind) or ("v7" in kind) or ("7x" in kind):
        # 4 MiB f32 block -> 16 MiB with in/out double buffering (< 32 MiB scoped default).
        return 8192
    # v5e and older: keep 2 MiB blocks (8 MiB double buffered < 16 MiB scoped default).
    return 4096


def _scale_kernel(params_ref, x_ref, o_ref):
    # Elementwise hot path: cast in, compute in f32 on the VPU (multiply, not
    # divide -- the reciprocal is precomputed on the host), cast on store.
    x_min = params_ref[0]
    inv_range = params_ref[1]
    xf = x_ref[...].astype(jnp.float32)
    o_ref[...] = ((xf - x_min) * inv_range).astype(o_ref.dtype)


def _scale_impl(x, params, *, min_rows):
    # Output dtype follows plain-JAX promotion of the reference formula with
    # Python-float bounds (floats keep their dtype, ints promote to float).
    out_dtype = jax.eval_shape(
        lambda a: (a - 0.5) / 2.0, jax.ShapeDtypeStruct(x.shape, x.dtype)
    ).dtype

    total = x.size
    row_align = _row_alignment(x.dtype, out_dtype)
    rows128 = pl.cdiv(total, LANES)

    def _xla_fallback():
        # Small tensors: XLA's fused elementwise is already at HBM roofline and
        # avoids the pallas_call fixed overhead + wrapper plumbing.
        return ((x.astype(jnp.float32) - params[0]) * params[1]).astype(out_dtype)

    if rows128 < max(min_rows, row_align):
        return _xla_fallback()

    smem_spec = pl.BlockSpec(memory_space=pltpu.MemorySpace.SMEM)
    cparams = pltpu.CompilerParams(dimension_semantics=("parallel",))

    if total % LANES == 0:
        # Lane-dense 2-D slab; zero pad / zero slice.
        lanes = LANES
        if total % WIDE_LANES == 0 and (total // WIDE_LANES) >= row_align:
            lanes = WIDE_LANES
        rows = total // lanes
        budget_rows = (_block_rows_budget() * LANES) // lanes
        # Aim for >= ~4 grid steps (so 'parallel' shards across both v7x
        # TensorCores) while staying within the per-step VMEM block budget.
        tile_rows = max(row_align,
                        min(budget_rows, _round_up(pl.cdiv(rows, 4), row_align)))
        out = pl.pallas_call(
            _scale_kernel,
            out_shape=jax.ShapeDtypeStruct((rows, lanes), out_dtype),
            grid=(pl.cdiv(rows, tile_rows),),
            in_specs=[smem_spec,
                      pl.BlockSpec((tile_rows, lanes), lambda i: (i, 0))],
            out_specs=pl.BlockSpec((tile_rows, lanes), lambda i: (i, 0)),
            compiler_params=cparams,
        )(params, x.reshape(rows, lanes))
        return out.reshape(x.shape)

    # Ragged path (total % 128 != 0): stream the flat 1-D array and let Pallas
    # mask the partial final block.  No jnp.pad and no output slice, so the
    # only HBM traffic is the kernel's own read + write.
    blk = _round_down(min(total, RAGGED_BLOCK_ELEMS), WIDE_LANES)
    if blk == 0:
        return _xla_fallback()
    flat = x.reshape(-1)
    out = pl.pallas_call(
        _scale_kernel,
        out_shape=jax.ShapeDtypeStruct((total,), out_dtype),
        grid=(pl.cdiv(total, blk),),
        in_specs=[smem_spec, pl.BlockSpec((blk,), lambda i: (i,))],
        out_specs=pl.BlockSpec((blk,), lambda i: (i,)),
        compiler_params=cparams,
    )(params, flat)
    return out.reshape(x.shape)


_scale = jax.jit(_scale_impl, static_argnames=("min_rows",))


class DatasetScaler:
    def __init__(self, x_min, x_max, min_rows_for_pallas=1024):
        """Scale x to (x - x_min) / (x_max - x_min); identity if x_min == x_max.

        min_rows_for_pallas: minimum number of 128-lane rows before the Pallas
        path is used (smaller tensors use XLA's fused elementwise).  Lower it
        only for testing.  NOTE: scalar x_min / x_max assumed (as in the
        PyTorch module's `==` check).
        """
        self.x_min = x_min
        self.x_max = x_max
        self.min_rows_for_pallas = int(min_rows_for_pallas)
        if self.x_min != self.x_max:
            # Host-side reciprocal: the kernel multiplies instead of dividing.
            self._params = jnp.array(
                [float(self.x_min), 1.0 / (float(self.x_max) - float(self.x_min))],
                dtype=jnp.float32,
            )
        else:
            self._params = None

    def __call__(self, x):
        # Static Python-level branch, identical to the PyTorch module.
        if self.x_min == self.x_max:
            return x
        x = jnp.asarray(x)
        return _scale(x, self._params, min_rows=self.min_rows_for_pallas)


if __name__ == "__main__":
    key = jax.random.PRNGKey(0)
    x_min, x_max = -2.0, 5.0

    # Tiny threshold so these small demo shapes exercise the Pallas paths
    # (the production default keeps sub-512KiB tensors on fused XLA).
    scaler = DatasetScaler(x_min, x_max, min_rows_for_pallas=1)

    # 1) 128-divisible NCHW input: lane-dense 2-D slab path (no pad / slice).
    x = jax.random.normal(key, (2, 4, 16, 16), dtype=jnp.float32) * 3.0 + 1.0
    y = jax.block_until_ready(scaler(x))
    y_ref = (x - x_min) / (x_max - x_min)
    assert y.shape == x.shape and y.dtype == y_ref.dtype
    assert jnp.allclose(y, y_ref, atol=1e-6, rtol=1e-5), "mismatch vs reference"

    # 2) Non-128-divisible size: flat 1-D path, Pallas masks the ragged final block.
    x2 = jax.random.normal(jax.random.PRNGKey(1), (2, 3, 33, 33), dtype=jnp.float32)
    y2 = jax.block_until_ready(scaler(x2))
    y2_ref = (x2 - x_min) / (x_max - x_min)
    assert jnp.allclose(y2, y2_ref, atol=1e-6, rtol=1e-5), "mismatch (ragged case)"

    # 3) Integer input: in-kernel cast + float32 promotion, matching the reference.
    xi = jax.random.randint(jax.random.PRNGKey(2), (4, 8, 32), -3, 10, dtype=jnp.int32)
    yi = jax.block_until_ready(scaler(xi))
    yi_ref = (xi - x_min) / (x_max - x_min)
    assert yi.dtype == yi_ref.dtype
    assert jnp.allclose(yi, yi_ref, atol=1e-6, rtol=1e-5), "mismatch (int case)"

    # 4) Production threshold: small tensor falls back to fused XLA elementwise.
    y3 = jax.block_until_ready(DatasetScaler(x_min, x_max)(x))
    assert jnp.allclose(y3, y_ref, atol=1e-6, rtol=1e-5), "mismatch (fallback case)"

    # 5) Degenerate x_min == x_max: identity (static branch), dtype preserved.
    y_id = jax.block_until_ready(DatasetScaler(3.0, 3.0)(x))
    assert jnp.array_equal(y_id, x), "identity branch mismatch"

    print("KERNEL_OK")
</pallas_src>

<mosaic_0001>
module attributes {stable_mosaic.version = 11 : i64} {
  func.func @_scale_kernel(%arg0: i32, %arg1: memref<2xf32, #tpu.memory_space<smem>>, %arg2: memref<8x128xf32, #tpu.memory_space<vmem>>, %arg3: memref<8x128xf32, #tpu.memory_space<vmem>>) attributes {dimension_semantics = [#tpu.dimension_semantics<parallel>], iteration_bounds = array<i64: 2>, scalar_prefetch = 0 : i64, scratch_operands = 0 : i64, tpu.core_type = #tpu.core_type<tc>, window_params = [{transform_indices = @transform_0, window_bounds = array<i64: 2>}, {transform_indices = @transform_1, window_bounds = array<i64: 8, 128>}, {transform_indices = @transform_2, window_bounds = array<i64: 8, 128>}]} {
    %c0 = arith.constant 0 : index
    %0 = memref.load %arg1[%c0] : memref<2xf32, #tpu.memory_space<smem>>
    %c1 = arith.constant 1 : index
    %1 = memref.load %arg1[%c1] : memref<2xf32, #tpu.memory_space<smem>>
    %c0_0 = arith.constant 0 : index
    %c0_1 = arith.constant 0 : index
    %2 = vector.load %arg2[%c0_0, %c0_1] : memref<8x128xf32, #tpu.memory_space<vmem>>, vector<8x128xf32>
    %3 = vector.broadcast %0 : f32 to vector<8x128xf32>
    %4 = arith.subf %2, %3 : vector<8x128xf32>
    %5 = vector.broadcast %1 : f32 to vector<8x128xf32>
    %6 = arith.mulf %4, %5 : vector<8x128xf32>
    %c0_2 = arith.constant 0 : index
    %c0_3 = arith.constant 0 : index
    %7 = vector.load %arg3[%c0_2, %c0_3] : memref<8x128xf32, #tpu.memory_space<vmem>>, vector<8x128xf32>
    tpu.vector_store %arg3[%c0_2, %c0_3], %6 {strides = array<i32>} : memref<8x128xf32, #tpu.memory_space<vmem>>, vector<8x128xf32>,
    return
  }
  func.func @transform_0(%arg0: i32) -> i32 {
    %c0_i32 = arith.constant 0 : i32
    %c0_i32_0 = arith.constant 0 : i32
    return %c0_i32 : i32
  }
  func.func @transform_1(%arg0: i32) -> (i32, i32) {
    %c0_i32 = arith.constant 0 : i32
    %c0_i32_0 = arith.constant 0 : i32
    return %arg0, %c0_i32 : i32, i32
  }
  func.func @transform_2(%arg0: i32) -> (i32, i32) {
    %c0_i32 = arith.constant 0 : i32
    %c0_i32_0 = arith.constant 0 : i32
    return %arg0, %c0_i32 : i32, i32
  }
}

</mosaic_0001>

<llo_original>
// kernel: _scale_impl.1
$region0: #{_scale_impl.1}
  #allocation0 [shape = 'u32[]', space=smem, size = 0x4, offset = 0x4, fixed_abs, tag = 'smem constant byte address 0x4 - core index']
  #allocation1 [shape = 'u32[144,128]{1,0:T(1,128)}', space=vmem, size = 0x12000, scoped, tag = 'internal scratch']
  %s0 = inlined_call_operand.vmem [shape: f32[2], index: 0, kind: input, shape index: {}]
  %s1 = inlined_call_operand.vmem [shape: f32[16,128], index: 1, kind: input, shape index: {}]
  %s2 = inlined_call_operand.vmem [shape: f32[16,128], index: 2, kind: output, shape index: {}]
  %s3 = sld [smem:[#allocation0]]
  $region45: #{_scale_impl.1} parent=0
    _
  %s5 = ssub.s32 1, %s3
  %s6 = scalar_select 0, %s5, %s3
  $region1: #{_scale_impl.1} parent=0
    #allocation2 [shape = 'u8[512]{0}', space=smem, size = 0x200, scoped, tag = 'input window, operand 0, single buffered']
    #allocation3 [shape = 's32[2]{0}', space=sflag, size = 0x8, scoped, tag = 'scoped memory for _scale_impl.1']
    %7 = vsyncpa [#allocation3], 0
    loop: start=0, step=1, limit=4
    $region2: #{_scale_impl.1} parent=1 // loop_pre_header
      _
    $region3: #{_scale_impl.1} parent=1 // loop_header
      %s9 = sphi 0, %s13
      %p10 = scmp.ge.s32.totalorder %s9, 4
      %s17 = sphi 0, %s17
      %s19 = sphi 0, %s17
      %s20 = sphi 0, %s19
      %s34 = sphi 0, %s20
      %s40 = sphi 0, %s42
      %s43 = sphi 0, %s40
      %s44 = sphi 0, %s43
      %s60 = sphi 0, %s44
      %s66 = sphi 0, %s68
      %s69 = sphi 0, %s66
      %s70 = sphi 0, %s69
      %s86 = sphi 0, %s70
    $region4: #{_scale_impl.1} parent=1 // loop_header_branch
      %12 = sbr.rel (%p10) target = $region8
    $region5: #{_scale_impl.1} parent=1 // loop_body
      %s14 = ssub.s32 %s9, 1
      %s15 = ssub.s32 %s9, 2
      %s16 = sadd.s32 %s9, 1
      %s18 = sadd.s32 %s17, 1
      %p21 = scmp.eq.s32.totalorder %s9, 1
      %p22 = scmp.ne.s32.totalorder %s17, %s19
      %p23 = scmp.eq.s32.totalorder %s9, 0
      %p24 = por %p22, %p23
      %p25 = scmp.ne.s32.totalorder %s17, %s19
      %p26 = scmp.eq.s32.totalorder %s14, 1
      %p27 = por %p25, %p26
      %p28 = scmp.ne.s32.totalorder %s19, %s20
      %p29 = scmp.eq.s32.totalorder %s14, 0
      %p30 = por %p28, %p29
      %p31 = scmp.ne.s32.totalorder %s19, %s20
      %p32 = scmp.eq.s32.totalorder %s15, 1
      %p33 = por %p31, %p32
      %p35 = scmp.ne.s32.totalorder %s20, %s34
      %p36 = scmp.eq.s32.totalorder %s15, 0
      %p37 = por %p35, %p36
      %s38 = ssub.s32 %s9, %s16
      %p39 = scmp.eq.s32.totalorder %s38, 0
      %s41 = sadd.s32 %s40, 1
      %s42 = scalar_select %p39, %s40, %s41
      %p45 = pneg %p39
      %p46 = scmp.eq.s32.totalorder %s9, 1
      %p47 = por %p45, %p46
      %p48 = scmp.ne.s32.totalorder %s40, %s43
      %p49 = scmp.eq.s32.totalorder %s9, 0
      %p50 = por %p48, %p49
      %p51 = scmp.ne.s32.totalorder %s40, %s43
      %p52 = scmp.eq.s32.totalorder %s14, 1
      %p53 = por %p51, %p52
      %p54 = scmp.ne.s32.totalorder %s43, %s44
      %p55 = scmp.eq.s32.totalorder %s14, 0
      %p56 = por %p54, %p55
      %p57 = scmp.ne.s32.totalorder %s43, %s44
      %p58 = scmp.eq.s32.totalorder %s15, 1
      %p59 = por %p57, %p58
      %p61 = scmp.ne.s32.totalorder %s44, %s60
      %p62 = scmp.eq.s32.totalorder %s15, 0
      %p63 = por %p61, %p62
      %s64 = ssub.s32 %s9, %s16
      %p65 = scmp.eq.s32.totalorder %s64, 0
      %s67 = sadd.s32 %s66, 1
      %s68 = scalar_select %p65, %s66, %s67
      %p71 = pneg %p65
      %p72 = scmp.eq.s32.totalorder %s9, 1
      %p73 = por %p71, %p72
      %p74 = scmp.ne.s32.totalorder %s66, %s69
      %p75 = scmp.eq.s32.totalorder %s9, 0
      %p76 = por %p74, %p75
      %p77 = scmp.ne.s32.totalorder %s66, %s69
      %p78 = scmp.eq.s32.totalorder %s14, 1
      %p79 = por %p77, %p78
      %p80 = scmp.ne.s32.totalorder %s69, %s70
      %p81 = scmp.eq.s32.totalorder %s14, 0
      %p82 = por %p80, %p81
      %p83 = scmp.ne.s32.totalorder %s69, %s70
      %p84 = scmp.eq.s32.totalorder %s15, 1
      %p85 = por %p83, %p84
      %p87 = scmp.ne.s32.totalorder %s70, %s86
      %p88 = scmp.eq.s32.totalorder %s15, 0
      %p89 = por %p87, %p88
      %p90 = scmp.le.s32.totalorder 1, %s9
      %p91 = scmp.lt.s32.totalorder %s9, 3
      %p92 = pnand %p90, %p91
      %p93 = pneg %p92
      // Predicated region
      $region9: #{_scale_impl.1} parent=5 // pred_check
        _
      $region10: #{_scale_impl.1} parent=5 // pred_check_branch
        %95 = sbr.rel (%p92) target = $region12
      $region11: #{_scale_impl.1} parent=5 // pred_region
        %s96 = ssub.s32 %s9, 1
        // Predicated region
        $region13: #{_scale_impl.1} parent=11 // pred_check
          %p97 = pneg %p30
        $region14: #{_scale_impl.1} parent=11 // pred_check_branch
          %99 = sbr.rel (%p97) target = $region16
        $region15: #{_scale_impl.1} parent=11 // pred_region
          %s101 = ssub.s32 16, 16
          %102 = vsyncadd [#allocation3], %s101
          %s104 = sshll.u32 %s0, 4
          %s105 = int_to_ptr.vmem [resolvable:$true] %s104
          %107 = dma.vmem_to_smem %s105, 16, [#allocation2], [#allocation3]
        $region16: #{_scale_impl.1} parent=11 // pred_fallthru
          _
      $region12: #{_scale_impl.1} parent=5 // pred_fallthru
        _
      %p108 = scmp.lt.s32.totalorder %s9, 2
      // Predicated region
      $region17: #{_scale_impl.1} parent=5 // pred_check
        %p109 = pneg %p108
      $region18: #{_scale_impl.1} parent=5 // pred_check_branch
        %111 = sbr.rel (%p109) target = $region20
      $region19: #{_scale_impl.1} parent=5 // pred_region
        // Predicated region
        $region21: #{_scale_impl.1} parent=19 // pred_check
          %p112 = pneg %p50
        $region22: #{_scale_impl.1} parent=19 // pred_check_branch
          %114 = sbr.rel (%p112) target = $region24
        $region23: #{_scale_impl.1} parent=19 // pred_region
          %p115 = scmp.lt.s32.totalorder %s9, 1
          %s116 = scalar_select %p115, %s9, 1
          %s117 = smul.addr %s116, 8
          %s118 = scalar_lea.vmem %s1, %s117
        $region24: #{_scale_impl.1} parent=19 // pred_fallthru
          _
      $region20: #{_scale_impl.1} parent=5 // pred_fallthru
        _
      %p119 = scmp.le.s32.totalorder 1, %s9
      %p120 = scmp.lt.s32.totalorder %s9, 3
      %p121 = pnand %p119, %p120
      %p122 = pneg %p121
      // Predicated region
      $region25: #{_scale_impl.1} parent=5 // pred_check
        _
      $region26: #{_scale_impl.1} parent=5 // pred_check_branch
        %124 = sbr.rel (%p121) target = $region28
      $region27: #{_scale_impl.1} parent=5 // pred_region
        %s125 = ssub.s32 %s9, 1
        // Predicated region
        $region29: #{_scale_impl.1} parent=27 // pred_check
          %p126 = pneg %p30
        $region30: #{_scale_impl.1} parent=27 // pred_check_branch
          %128 = sbr.rel (%p126) target = $region32
        $region31: #{_scale_impl.1} parent=27 // pred_region
          %129 = dma.done [#allocation3], 16
        $region32: #{_scale_impl.1} parent=27 // pred_fallthru
          _
        %130 = sfence
        %p131 = pneg %p30
        %p132 = pneg %p27
        %p133 = scmp.lt.s32.totalorder %s14, 1
        %s134 = scalar_select %p133, %s14, 1
        %s135 = smul.addr %s134, 8
        %s136 = scalar_lea.vmem %s1, %s135
        %p137 = pneg %p56
        %p138 = pneg %p53
        %p139 = pneg %p82
        %p140 = pneg %p79
        %p141 = scmp.lt.s32.totalorder %s14, 1
        %s142 = scalar_select %p141, %s14, 1
        %s143 = smul.addr %s142, 8
        %s144 = scalar_lea.vmem %s2, %s143
        %p145 = scmp.lt.s32.totalorder %s14, 1
        %s146 = scalar_select %p145, %s14, 1
        %s147 = smul.addr %s146, 8
        %s148 = scalar_lea.vmem %s1, %s147
        %p149 = scmp.lt.s32.totalorder %s14, 1
        %s150 = scalar_select %p149, %s14, 1
        %s151 = smul.addr %s150, 8
        %s152 = scalar_lea.vmem %s2, %s151
        %s153 = sld [smem:[#allocation2]]
        %s154 = sld [smem:[#allocation2 + $0x1]]
        %v155 = vld [vmem:[%s148] sm:$0xff]
        %v156 = vstv %s153
        %v157 = vsub.f32 %v155, %v156
        %v158 = vstv %s154
        %v159 = vmul.f32 %v157, %v158
        %160 = vst [vmem:[%s152] sm:$0xff] %v159
        %p161 = scmp.lt.s32.totalorder %s14, 1
        %s162 = scalar_select %p161, %s14, 1
        %s163 = smul.addr %s162, 8
        %s164 = scalar_lea.vmem %s2, %s163
        // Predicated region
        $region33: #{_scale_impl.1} parent=27 // pred_check
          %p165 = pneg %p79
        $region34: #{_scale_impl.1} parent=27 // pred_check_branch
          %167 = sbr.rel (%p165) target = $region36
        $region35: #{_scale_impl.1} parent=27 // pred_region
          _
        $region36: #{_scale_impl.1} parent=27 // pred_fallthru
          _
      $region28: #{_scale_impl.1} parent=5 // pred_fallthru
        _
      %p168 = scmp.le.s32.totalorder 2, %s9
      // Predicated region
      $region37: #{_scale_impl.1} parent=5 // pred_check
        %p169 = pneg %p168
      $region38: #{_scale_impl.1} parent=5 // pred_check_branch
        %171 = sbr.rel (%p169) target = $region40
      $region39: #{_scale_impl.1} parent=5 // pred_region
        %s172 = ssub.s32 %s9, 2
        // Predicated region
        $region41: #{_scale_impl.1} parent=39 // pred_check
          %p173 = pneg %p85
        $region42: #{_scale_impl.1} parent=39 // pred_check_branch
          %175 = sbr.rel (%p173) target = $region44
        $region43: #{_scale_impl.1} parent=39 // pred_region
          %p176 = scmp.lt.s32.totalorder %s15, 1
          %s177 = scalar_select %p176, %s15, 1
          %s178 = smul.addr %s177, 8
          %s179 = scalar_lea.vmem %s2, %s178
        $region44: #{_scale_impl.1} parent=39 // pred_fallthru
          _
      $region40: #{_scale_impl.1} parent=5 // pred_fallthru
        _
    $region6: #{_scale_impl.1} parent=1 // loop_footer
      %s13 = sadd.s32 1, %s9
    $region7: #{_scale_impl.1} parent=1 // loop_footer_branch
      %8 = sbr.rel target = $region3
    $region8: #{_scale_impl.1} parent=1 // loop_exit
      _
    %180 = vsyncpa [#allocation3], 1
    %s181 = scalar_lea.sflag [#allocation3], 1
    %182 = vsyncpa %s181, 1

</llo_original>
